<compile_context>
chip_gen: v7x
topology: tpu7x:2x2x1
jax: 0.10.0
libtpu: 0.0.40
codegen_flags: <defaults>
</compile_context>

<pallas_src>
import functools

import jax
import jax.numpy as jnp
from jax.experimental import pallas as pl
from jax.experimental.pallas import tpu as pltpu


_LANE = 128
_SUBLANE = 8


def _activations_kernel(x_ref, relu_ref, sig_ref, tanh_ref, sm_ref):
    x = x_ref[...]

    # nn.ReLU / nn.Sigmoid / nn.Tanh: elementwise in the input dtype.
    relu_ref[...] = jnp.maximum(x, jnp.zeros((), x.dtype)).astype(relu_ref.dtype)
    sig_ref[...] = jax.nn.sigmoid(x).astype(sig_ref.dtype)
    tanh_ref[...] = jnp.tanh(x).astype(tanh_ref.dtype)

    # nn.Softmax(dim=1): numerically stable reduction over the feature (lane)
    # axis, accumulated in f32.  Exact divide (not approx reciprocal): this
    # kernel is HBM-bound, so exact parity with torch/jax softmax is free.
    x32 = x.astype(jnp.float32)
    m = jnp.max(x32, axis=1, keepdims=True)
    e = jnp.exp(x32 - m)
    denom = jnp.sum(e, axis=1, keepdims=True)
    sm_ref[...] = (e / denom).astype(sm_ref.dtype)


def _round_up(v, m):
    return ((v + m - 1) // m) * m


@functools.lru_cache(maxsize=1)
def _vmem_params():
    """Generation-aware (scoped_vmem_limit_bytes, io_budget_bytes)."""
    try:
        cap = int(pltpu.get_tpu_info().vmem_capacity_bytes)
    except Exception:
        cap = 64 << 20  # conservative (v7x-class 64 MiB/TC) fallback
    if cap >= (100 << 20):
        # v5e / v6e: 128 MiB physical VMEM.
        return (100 << 20, 80 << 20)
    # v7x-class: 64 MiB per TensorCore -> leave headroom for compiler
    # internal scratch, semaphores and the f32 softmax temporaries.
    return (44 << 20, 32 << 20)


def _choose_batch_tile(batch, features, itemsize, vmem_budget_bytes,
                       max_tile_rows=512):
    """VMEM-budget-driven batch tile.

    Per-row VMEM cost:
      * pipelined IO: 5 arrays (1 in + 4 out) x 2 double-buffers
                      x features x itemsize
      * f32 softmax temporaries (x32 / exp kept live across the row-sum):
        ~2 x features x 4 bytes
    Tile is a multiple of 8 (sublane), capped at `max_tile_rows` (mem-bound
    roofline saturates well below that) and capped so the grid keeps >= 4
    steps (>= 2 when the batch is small) for pipelining and for v7x's two
    TensorCores.
    """
    per_row_bytes = 10 * features * itemsize + 8 * features
    tile = (vmem_budget_bytes // per_row_bytes) // _SUBLANE * _SUBLANE
    tile = max(_SUBLANE, min(tile, max_tile_rows))

    if batch >= 4 * _SUBLANE:
        tile = min(tile, max(_SUBLANE, (batch // 4) // _SUBLANE * _SUBLANE))
    elif batch >= 2 * _SUBLANE:
        tile = min(tile, max(_SUBLANE, (batch // 2) // _SUBLANE * _SUBLANE))

    # Never larger than the (sublane-rounded) batch itself.
    tile = min(tile, _round_up(batch, _SUBLANE))
    return tile


@jax.jit
def base_model_activations(x):
    """Apply ReLU / Sigmoid / Tanh / Softmax(dim=1) to x of shape (B, F)."""
    B, F = x.shape
    itemsize = jnp.dtype(x.dtype).itemsize

    vmem_limit_bytes, io_budget_bytes = _vmem_params()
    tile = _choose_batch_tile(B, F, itemsize, io_budget_bytes)

    # Softmax needs the whole feature row, so the feature axis is not tiled:
    # block F == full array dim satisfies the (8,128) rule with no padding.
    # The batch axis is tiled with a ragged last block (Pallas masks the
    # out-of-range rows on store; garbage rows never contaminate valid rows
    # because every row's activations/softmax depend only on that row).
    blk = pl.BlockSpec((tile, F), lambda i: (i, 0))
    out_sds = jax.ShapeDtypeStruct((B, F), x.dtype)

    return pl.pallas_call(
        _activations_kernel,
        out_shape=(out_sds, out_sds, out_sds, out_sds),
        grid_spec=pltpu.PrefetchScalarGridSpec(
            num_scalar_prefetch=0,
            grid=(pl.cdiv(B, tile),),
            in_specs=[blk],
            out_specs=[blk, blk, blk, blk],
        ),
        compiler_params=pltpu.CompilerParams(
            dimension_semantics=("parallel",),
            vmem_limit_bytes=vmem_limit_bytes,
        ),
    )(x)


def _reference(x):
    x32 = x.astype(jnp.float32)
    relu = jnp.maximum(x32, 0.0).astype(x.dtype)
    sig = jax.nn.sigmoid(x32).astype(x.dtype)
    tnh = jnp.tanh(x32).astype(x.dtype)
    sm = jax.nn.softmax(x32, axis=1).astype(x.dtype)
    return relu, sig, tnh, sm


def _check(x, tol=1e-5):
    outs = jax.block_until_ready(base_model_activations(x))
    refs = _reference(x)
    for name, got, ref in zip(["relu", "sigmoid", "tanh", "softmax"], outs, refs):
        assert got.shape == ref.shape and got.dtype == ref.dtype, name
        err = float(jnp.max(jnp.abs(got.astype(jnp.float32)
                                    - ref.astype(jnp.float32))))
        assert err < tol, f"{name} mismatch: max abs err {err}"


if __name__ == "__main__":
    key = jax.random.PRNGKey(0)
    k0, k1 = jax.random.split(key)

    # Aligned case: batch=16, n_inputs=128 (tile=8 -> 2 grid steps, exercises
    # the multi-step / megacore path).
    _check(jax.random.normal(k0, (16, 128), dtype=jnp.float32))

    # Ragged case: unaligned batch and feature dims (no padding / slicing in
    # the wrapper; Pallas masks the partial last block).
    _check(jax.random.normal(k1, (13, 100), dtype=jnp.float32))

    print("KERNEL_OK")
</pallas_src>

<mosaic_0001>
module attributes {stable_mosaic.version = 11 : i64} {
  func.func @_activations_kernel(%arg0: i32, %arg1: memref<8x128xf32, #tpu.memory_space<vmem>>, %arg2: memref<8x128xf32, #tpu.memory_space<vmem>>, %arg3: memref<8x128xf32, #tpu.memory_space<vmem>>, %arg4: memref<8x128xf32, #tpu.memory_space<vmem>>, %arg5: memref<8x128xf32, #tpu.memory_space<vmem>>) attributes {dimension_semantics = [#tpu.dimension_semantics<parallel>], iteration_bounds = array<i64: 2>, scalar_prefetch = 0 : i64, scratch_operands = 0 : i64, tpu.core_type = #tpu.core_type<tc>, window_params = [{transform_indices = @transform_0, window_bounds = array<i64: 8, 128>}, {transform_indices = @transform_1, window_bounds = array<i64: 8, 128>}, {transform_indices = @transform_2, window_bounds = array<i64: 8, 128>}, {transform_indices = @transform_3, window_bounds = array<i64: 8, 128>}, {transform_indices = @transform_4, window_bounds = array<i64: 8, 128>}]} {
    %c0 = arith.constant 0 : index
    %c0_0 = arith.constant 0 : index
    %0 = vector.load %arg1[%c0, %c0_0] : memref<8x128xf32, #tpu.memory_space<vmem>>, vector<8x128xf32>
    %cst = arith.constant 0.000000e+00 : f32
    %1 = vector.broadcast %cst : f32 to vector<8x128xf32>
    %2 = arith.maximumf %0, %1 : vector<8x128xf32>
    %c0_1 = arith.constant 0 : index
    %c0_2 = arith.constant 0 : index
    %3 = vector.load %arg2[%c0_1, %c0_2] : memref<8x128xf32, #tpu.memory_space<vmem>>, vector<8x128xf32>
    tpu.vector_store %arg2[%c0_1, %c0_2], %2 {strides = array<i32>} : memref<8x128xf32, #tpu.memory_space<vmem>>, vector<8x128xf32>,
    %4 = arith.negf %0 : vector<8x128xf32>
    %5 = math.exp %4 : vector<8x128xf32>
    %cst_3 = arith.constant 1.000000e+00 : f32
    %6 = vector.broadcast %cst_3 : f32 to vector<8x128xf32>
    %7 = arith.addf %6, %5 : vector<8x128xf32>
    %8 = arith.divf %6, %7 : vector<8x128xf32>
    %c0_4 = arith.constant 0 : index
    %c0_5 = arith.constant 0 : index
    %9 = vector.load %arg3[%c0_4, %c0_5] : memref<8x128xf32, #tpu.memory_space<vmem>>, vector<8x128xf32>
    tpu.vector_store %arg3[%c0_4, %c0_5], %8 {strides = array<i32>} : memref<8x128xf32, #tpu.memory_space<vmem>>, vector<8x128xf32>,
    %10 = math.tanh %0 : vector<8x128xf32>
    %c0_6 = arith.constant 0 : index
    %c0_7 = arith.constant 0 : index
    %11 = vector.load %arg4[%c0_6, %c0_7] : memref<8x128xf32, #tpu.memory_space<vmem>>, vector<8x128xf32>
    tpu.vector_store %arg4[%c0_6, %c0_7], %10 {strides = array<i32>} : memref<8x128xf32, #tpu.memory_space<vmem>>, vector<8x128xf32>,
    %cst_8 = arith.constant dense<0xFF800000> : vector<8xf32>
    %12 = vector.multi_reduction <maximumf>, %0, %cst_8 [1] : vector<8x128xf32> to vector<8xf32>
    %13 = vector.shape_cast %12 : vector<8xf32> to vector<8x1xf32>
    %14 = vector.broadcast %13 : vector<8x1xf32> to vector<8x128xf32>
    %15 = arith.subf %0, %14 : vector<8x128xf32>
    %16 = math.exp %15 : vector<8x128xf32>
    %cst_9 = arith.constant dense<0.000000e+00> : vector<8xf32>
    %17 = vector.multi_reduction <add>, %16, %cst_9 [1] : vector<8x128xf32> to vector<8xf32>
    %18 = vector.shape_cast %17 : vector<8xf32> to vector<8x1xf32>
    %19 = vector.broadcast %18 : vector<8x1xf32> to vector<8x128xf32>
    %20 = arith.divf %16, %19 : vector<8x128xf32>
    %c0_10 = arith.constant 0 : index
    %c0_11 = arith.constant 0 : index
    %21 = vector.load %arg5[%c0_10, %c0_11] : memref<8x128xf32, #tpu.memory_space<vmem>>, vector<8x128xf32>
    tpu.vector_store %arg5[%c0_10, %c0_11], %20 {strides = array<i32>} : memref<8x128xf32, #tpu.memory_space<vmem>>, vector<8x128xf32>,
    return
  }
  func.func @transform_0(%arg0: i32) -> (i32, i32) {
    %c0_i32 = arith.constant 0 : i32
    %c0_i32_0 = arith.constant 0 : i32
    return %arg0, %c0_i32 : i32, i32
  }
  func.func @transform_1(%arg0: i32) -> (i32, i32) {
    %c0_i32 = arith.constant 0 : i32
    %c0_i32_0 = arith.constant 0 : i32
    return %arg0, %c0_i32 : i32, i32
  }
  func.func @transform_2(%arg0: i32) -> (i32, i32) {
    %c0_i32 = arith.constant 0 : i32
    %c0_i32_0 = arith.constant 0 : i32
    return %arg0, %c0_i32 : i32, i32
  }
  func.func @transform_3(%arg0: i32) -> (i32, i32) {
    %c0_i32 = arith.constant 0 : i32
    %c0_i32_0 = arith.constant 0 : i32
    return %arg0, %c0_i32 : i32, i32
  }
  func.func @transform_4(%arg0: i32) -> (i32, i32) {
    %c0_i32 = arith.constant 0 : i32
    %c0_i32_0 = arith.constant 0 : i32
    return %arg0, %c0_i32 : i32, i32
  }
}

</mosaic_0001>

<llo_original>
// kernel: base_model_activations.1
$region0: #{base_model_activations.1}
  #allocation0 [shape = 'u32[]', space=smem, size = 0x4, offset = 0x4, fixed_abs, tag = 'smem constant byte address 0x4 - core index']
  #allocation1 [shape = 'u32[144,128]{1,0:T(1,128)}', space=vmem, size = 0x12000, scoped, tag = 'internal scratch']
  %s0 = inlined_call_operand.hbm [shape: f32[16,128], index: 0, kind: input, shape index: {}]
  %s1 = inlined_call_operand.hbm [shape: f32[16,128], index: 1, kind: output, shape index: {0}]
  %s2 = inlined_call_operand.hbm [shape: f32[16,128], index: 2, kind: output, shape index: {1}]
  %s3 = inlined_call_operand.hbm [shape: f32[16,128], index: 3, kind: output, shape index: {2}]
  %s4 = inlined_call_operand.hbm [shape: f32[16,128], index: 4, kind: output, shape index: {3}]
  %5 = xla_tuple %s1, %s2, %s3, %s4
  %s6 = sld [smem:[#allocation0]]
  $region65: #{base_model_activations.1} parent=0
    _
  %s8 = ssub.s32 1, %s6
  %s9 = scalar_select 0, %s8, %s6
  $region1: #{base_model_activations.1} parent=0
    #allocation2 [shape = 'u8[8192]{0}', space=vmem, size = 0x2000, scoped, tag = 'input window, operand 0']
    #allocation3 [shape = 's32[2]{0}', space=sflag, size = 0x8, scoped, tag = 'scoped memory for base_model_activations.1']
    #allocation4 [shape = 's32[2]{0}', space=sflag, size = 0x8, scoped, tag = 'scoped memory for base_model_activations.1']
    #allocation5 [shape = 'u8[8192]{0}', space=vmem, size = 0x2000, scoped, tag = 'output window, operand 0']
    #allocation6 [shape = 'u8[8192]{0}', space=vmem, size = 0x2000, scoped, tag = 'output window, operand 1']
    #allocation7 [shape = 's32[2]{0}', space=sflag, size = 0x8, scoped, tag = 'scoped memory for base_model_activations.1']
    #allocation8 [shape = 'u8[8192]{0}', space=vmem, size = 0x2000, scoped, tag = 'output window, operand 2']
    #allocation9 [shape = 'u8[8192]{0}', space=vmem, size = 0x2000, scoped, tag = 'output window, operand 3']
    #allocation10 [shape = 's32[2]{0}', space=sflag, size = 0x8, scoped, tag = 'scoped memory for base_model_activations.1']
    %10 = vsyncpa [#allocation3], 0
    %s11 = scalar_lea.sflag [#allocation3], 1
    %12 = vsyncpa %s11, 0
    %13 = vsyncpa [#allocation4], 0
    %s14 = scalar_lea.sflag [#allocation4], 1
    %15 = vsyncpa %s14, 0
    %16 = vsyncpa [#allocation7], 0
    %s17 = scalar_lea.sflag [#allocation7], 1
    %18 = vsyncpa %s17, 0
    %19 = vsyncpa [#allocation10], 0
    %s20 = scalar_lea.sflag [#allocation10], 1
    %21 = vsyncpa %s20, 0
    loop: start=0, step=1, limit=4
    $region2: #{base_model_activations.1} parent=1 // loop_pre_header
      _
    $region3: #{base_model_activations.1} parent=1 // loop_header
      %s23 = sphi 0, %s27
      %p24 = scmp.ge.s32.totalorder %s23, 4
      %s33 = sphi 0, %s35
      %s36 = sphi 0, %s33
      %s37 = sphi 0, %s36
      %s53 = sphi 0, %s37
      %s59 = sphi 0, %s61
      %s62 = sphi 0, %s59
      %s63 = sphi 0, %s62
      %s79 = sphi 0, %s63
      %s85 = sphi 0, %s87
      %s88 = sphi 0, %s85
      %s89 = sphi 0, %s88
      %s105 = sphi 0, %s89
      %s111 = sphi 0, %s113
      %s114 = sphi 0, %s111
      %s115 = sphi 0, %s114
      %s131 = sphi 0, %s115
      %s137 = sphi 0, %s139
      %s140 = sphi 0, %s137
      %s141 = sphi 0, %s140
      %s157 = sphi 0, %s141
    $region4: #{base_model_activations.1} parent=1 // loop_header_branch
      %26 = sbr.rel (%p24) target = $region8
    $region5: #{base_model_activations.1} parent=1 // loop_body
      %s28 = ssub.s32 %s23, 1
      %s29 = ssub.s32 %s23, 2
      %s30 = sadd.s32 %s23, 1
      %s31 = ssub.s32 %s23, %s30
      %p32 = scmp.eq.s32.totalorder %s31, 0
      %s34 = sadd.s32 %s33, 1
      %s35 = scalar_select %p32, %s33, %s34
      %p38 = pneg %p32
      %p39 = scmp.eq.s32.totalorder %s23, 1
      %p40 = por %p38, %p39
      %p41 = scmp.ne.s32.totalorder %s33, %s36
      %p42 = scmp.eq.s32.totalorder %s23, 0
      %p43 = por %p41, %p42
      %p44 = scmp.ne.s32.totalorder %s33, %s36
      %p45 = scmp.eq.s32.totalorder %s28, 1
      %p46 = por %p44, %p45
      %p47 = scmp.ne.s32.totalorder %s36, %s37
      %p48 = scmp.eq.s32.totalorder %s28, 0
      %p49 = por %p47, %p48
      %p50 = scmp.ne.s32.totalorder %s36, %s37
      %p51 = scmp.eq.s32.totalorder %s29, 1
      %p52 = por %p50, %p51
      %p54 = scmp.ne.s32.totalorder %s37, %s53
      %p55 = scmp.eq.s32.totalorder %s29, 0
      %p56 = por %p54, %p55
      %s57 = ssub.s32 %s23, %s30
      %p58 = scmp.eq.s32.totalorder %s57, 0
      %s60 = sadd.s32 %s59, 1
      %s61 = scalar_select %p58, %s59, %s60
      %p64 = pneg %p58
      %p65 = scmp.eq.s32.totalorder %s23, 1
      %p66 = por %p64, %p65
      %p67 = scmp.ne.s32.totalorder %s59, %s62
      %p68 = scmp.eq.s32.totalorder %s23, 0
      %p69 = por %p67, %p68
      %p70 = scmp.ne.s32.totalorder %s59, %s62
      %p71 = scmp.eq.s32.totalorder %s28, 1
      %p72 = por %p70, %p71
      %p73 = scmp.ne.s32.totalorder %s62, %s63
      %p74 = scmp.eq.s32.totalorder %s28, 0
      %p75 = por %p73, %p74
      %p76 = scmp.ne.s32.totalorder %s62, %s63
      %p77 = scmp.eq.s32.totalorder %s29, 1
      %p78 = por %p76, %p77
      %p80 = scmp.ne.s32.totalorder %s63, %s79
      %p81 = scmp.eq.s32.totalorder %s29, 0
      %p82 = por %p80, %p81
      %s83 = ssub.s32 %s23, %s30
      %p84 = scmp.eq.s32.totalorder %s83, 0
      %s86 = sadd.s32 %s85, 1
      %s87 = scalar_select %p84, %s85, %s86
      %p90 = pneg %p84
      %p91 = scmp.eq.s32.totalorder %s23, 1
      %p92 = por %p90, %p91
      %p93 = scmp.ne.s32.totalorder %s85, %s88
      %p94 = scmp.eq.s32.totalorder %s23, 0
      %p95 = por %p93, %p94
      %p96 = scmp.ne.s32.totalorder %s85, %s88
      %p97 = scmp.eq.s32.totalorder %s28, 1
      %p98 = por %p96, %p97
      %p99 = scmp.ne.s32.totalorder %s88, %s89
      %p100 = scmp.eq.s32.totalorder %s28, 0
      %p101 = por %p99, %p100
      %p102 = scmp.ne.s32.totalorder %s88, %s89
      %p103 = scmp.eq.s32.totalorder %s29, 1
      %p104 = por %p102, %p103
      %p106 = scmp.ne.s32.totalorder %s89, %s105
      %p107 = scmp.eq.s32.totalorder %s29, 0
      %p108 = por %p106, %p107
      %s109 = ssub.s32 %s23, %s30
      %p110 = scmp.eq.s32.totalorder %s109, 0
      %s112 = sadd.s32 %s111, 1
      %s113 = scalar_select %p110, %s111, %s112
      %p116 = pneg %p110
      %p117 = scmp.eq.s32.totalorder %s23, 1
      %p118 = por %p116, %p117
      %p119 = scmp.ne.s32.totalorder %s111, %s114
      %p120 = scmp.eq.s32.totalorder %s23, 0
      %p121 = por %p119, %p120
      %p122 = scmp.ne.s32.totalorder %s111, %s114
      %p123 = scmp.eq.s32.totalorder %s28, 1
      %p124 = por %p122, %p123
      %p125 = scmp.ne.s32.totalorder %s114, %s115
      %p126 = scmp.eq.s32.totalorder %s28, 0
      %p127 = por %p125, %p126
      %p128 = scmp.ne.s32.totalorder %s114, %s115
      %p129 = scmp.eq.s32.totalorder %s29, 1
      %p130 = por %p128, %p129
      %p132 = scmp.ne.s32.totalorder %s115, %s131
      %p133 = scmp.eq.s32.totalorder %s29, 0
      %p134 = por %p132, %p133
      %s135 = ssub.s32 %s23, %s30
      %p136 = scmp.eq.s32.totalorder %s135, 0
      %s138 = sadd.s32 %s137, 1
      %s139 = scalar_select %p136, %s137, %s138
      %p142 = pneg %p136
      %p143 = scmp.eq.s32.totalorder %s23, 1
      %p144 = por %p142, %p143
      %p145 = scmp.ne.s32.totalorder %s137, %s140
      %p146 = scmp.eq.s32.totalorder %s23, 0
      %p147 = por %p145, %p146
      %p148 = scmp.ne.s32.totalorder %s137, %s140
      %p149 = scmp.eq.s32.totalorder %s28, 1
      %p150 = por %p148, %p149
      %p151 = scmp.ne.s32.totalorder %s140, %s141
      %p152 = scmp.eq.s32.totalorder %s28, 0
      %p153 = por %p151, %p152
      %p154 = scmp.ne.s32.totalorder %s140, %s141
      %p155 = scmp.eq.s32.totalorder %s29, 1
      %p156 = por %p154, %p155
      %p158 = scmp.ne.s32.totalorder %s141, %s157
      %p159 = scmp.eq.s32.totalorder %s29, 0
      %p160 = por %p158, %p159
      %p161 = scmp.le.s32.totalorder 1, %s23
      %p162 = scmp.lt.s32.totalorder %s23, 3
      %p163 = pnand %p161, %p162
      %p164 = pneg %p163
      // Predicated region
      $region9: #{base_model_activations.1} parent=5 // pred_check
        _
      $region10: #{base_model_activations.1} parent=5 // pred_check_branch
        %166 = sbr.rel (%p163) target = $region12
      $region11: #{base_model_activations.1} parent=5 // pred_region
        %s167 = ssub.s32 %s23, 1
      $region12: #{base_model_activations.1} parent=5 // pred_fallthru
        _
      %p168 = scmp.lt.s32.totalorder %s23, 2
      // Predicated region
      $region13: #{base_model_activations.1} parent=5 // pred_check
        %p169 = pneg %p168
      $region14: #{base_model_activations.1} parent=5 // pred_check_branch
        %171 = sbr.rel (%p169) target = $region16
      $region15: #{base_model_activations.1} parent=5 // pred_region
        // Predicated region
        $region17: #{base_model_activations.1} parent=15 // pred_check
          %p172 = pneg %p43
        $region18: #{base_model_activations.1} parent=15 // pred_check_branch
          %174 = sbr.rel (%p172) target = $region20
        $region19: #{base_model_activations.1} parent=15 // pred_region
          %s175 = sand.u32 %s33, 1
          %s176 = scalar_lea.sflag [#allocation3], %s175
          %s177 = sand.u32 %s33, 1
          %s178 = smul.addr %s177, 8
          %s179 = scalar_lea.vmem [#allocation2], %s178
          %s181 = ssub.s32 128, 128
          %182 = vsyncadd %s176, %s181
          %s183 = smul.addr %s23, 128
          %s184 = scalar_lea.hbm %s0, %s183
          %s186 = sshll.u32 %s179, 4
          %s187 = int_to_ptr.vmem [resolvable:$true] %s186
          %189 = dma.hbm_to_vmem [thread:$0]  %s184, 128, %s187, %s176
        $region20: #{base_model_activations.1} parent=15 // pred_fallthru
          _
      $region16: #{base_model_activations.1} parent=5 // pred_fallthru
        _
      %p190 = scmp.le.s32.totalorder 1, %s23
      %p191 = scmp.lt.s32.totalorder %s23, 3
      %p192 = pnand %p190, %p191
      %p193 = pneg %p192
      // Predicated region
      $region21: #{base_model_activations.1} parent=5 // pred_check
        _
      $region22: #{base_model_activations.1} parent=5 // pred_check_branch
        %195 = sbr.rel (%p192) target = $region24
      $region23: #{base_model_activations.1} parent=5 // pred_region
        %s196 = ssub.s32 %s23, 1
        %s197 = sand.u32 %s36, 1
        %s198 = scalar_lea.sflag [#allocation3], %s197
        %s199 = sand.u32 %s36, 1
        %s200 = smul.addr %s199, 8
        %s201 = scalar_lea.vmem [#allocation2], %s200
        // Predicated region
        $region25: #{base_model_activations.1} parent=23 // pred_check
          %p202 = pneg %p49
        $region26: #{base_model_activations.1} parent=23 // pred_check_branch
          %204 = sbr.rel (%p202) target = $region28
        $region27: #{base_model_activations.1} parent=23 // pred_region
          %205 = dma.done %s198, 128
        $region28: #{base_model_activations.1} parent=23 // pred_fallthru
          _
        %s206 = sand.u32 %s36, 1
        %s207 = scalar_lea.sflag [#allocation3], %s206
        %s208 = sand.u32 %s36, 1
        %s209 = smul.addr %s208, 8
        %s210 = scalar_lea.vmem [#allocation2], %s209
        %p211 = pneg %p49
        %p212 = pneg %p46
        %p213 = pneg %p75
        %p214 = pneg %p72
        %s215 = sand.u32 %s62, 1
        %s216 = scalar_lea.sflag [#allocation4], %s215
        %s217 = sand.u32 %s62, 1
        %s218 = smul.addr %s217, 8
        %s219 = scalar_lea.vmem [#allocation5], %s218
        %p220 = pneg %p101
        %p221 = pneg %p98
        %s222 = sand.u32 %s28, 1
        %s223 = scalar_lea.sflag [#allocation7], %s222
        %s224 = sand.u32 %s88, 1
        %s225 = smul.addr %s224, 8
        %s226 = scalar_lea.vmem [#allocation6], %s225
        %p227 = pneg %p127
        %p228 = pneg %p124
        %s229 = sand.u32 %s28, 1
        %s230 = scalar_lea.sflag [#allocation7], %s229
        %s231 = sand.u32 %s114, 1
        %s232 = smul.addr %s231, 8
        %s233 = scalar_lea.vmem [#allocation8], %s232
        %p234 = pneg %p153
        %p235 = pneg %p150
        %s236 = sand.u32 %s140, 1
        %s237 = scalar_lea.sflag [#allocation10], %s236
        %s238 = sand.u32 %s140, 1
        %s239 = smul.addr %s238, 8
        %s240 = scalar_lea.vmem [#allocation9], %s239
        %v241 = vld [vmem:[%s201] sm:$0xff]
        %v242 = vmax.f32 %v241, 0.0
        %243 = vst [vmem:[%s219] sm:$0xff] %v242
        %v244 = vxor.u32 %v241, 2147483648
        %v245 = vmul.f32 %v244, 1.442695
        %v246 = vpow.pop %v245
        %v247 = vadd.f32 %v246, 1.0
        %v248 = vrcp.pop %v247
        %v249 = vmul.f32 1.0, %v248
        %250 = vst [vmem:[%s226] sm:$0xff] %v249
        %v251 = vtanh.pop %v241
        %252 = vst [vmem:[%s233] sm:$0xff] %v251
        %253 = vmax.xlane.f32.xlu0 %v241
        %v254 = vpop.xlane.xlu0 %253
        %v255 = vsub.f32 %v241, %v254
        %v256 = vmul.f32 %v255, 1.442695
        %v257 = vpow.pop %v256
        %258 = vadd.xlane.f32.xlu0 %v257
        %v259 = vpop.xlane.xlu0 %258
        %v260 = vrcp.pop %v259
        %v261 = vmul.f32 %v257, %v260
        %262 = vst [vmem:[%s240] sm:$0xff] %v261
        %s263 = sand.u32 %s62, 1
        %s264 = scalar_lea.sflag [#allocation4], %s263
        %s265 = sand.u32 %s62, 1
        %s266 = smul.addr %s265, 8
        %s267 = scalar_lea.vmem [#allocation5], %s266
        %s268 = sand.u32 %s28, 1
        %s269 = scalar_lea.sflag [#allocation7], %s268
        %s270 = sand.u32 %s88, 1
        %s271 = smul.addr %s270, 8
        %s272 = scalar_lea.vmem [#allocation6], %s271
        %s273 = sand.u32 %s28, 1
        %s274 = scalar_lea.sflag [#allocation7], %s273
        %s275 = sand.u32 %s114, 1
        %s276 = smul.addr %s275, 8
        %s277 = scalar_lea.vmem [#allocation8], %s276
        %s278 = sand.u32 %s140, 1
        %s279 = scalar_lea.sflag [#allocation10], %s278
        %s280 = sand.u32 %s140, 1
        %s281 = smul.addr %s280, 8
        %s282 = scalar_lea.vmem [#allocation9], %s281
        // Predicated region
        $region29: #{base_model_activations.1} parent=23 // pred_check
          %p283 = pneg %p72
        $region30: #{base_model_activations.1} parent=23 // pred_check_branch
          %285 = sbr.rel (%p283) target = $region32
        $region31: #{base_model_activations.1} parent=23 // pred_region
          %s287 = ssub.s32 128, 128
          %288 = vsyncadd %s264, %s287
          %s289 = smul.addr %s28, 128
          %s290 = scalar_lea.hbm %s1, %s289
          %s292 = sshll.u32 %s267, 4
          %s293 = int_to_ptr.vmem [resolvable:$true] %s292
          %295 = dma.vmem_to_hbm [thread:$0]  %s293, 128, %s290, %s264
        $region32: #{base_model_activations.1} parent=23 // pred_fallthru
          _
        // Predicated region
        $region33: #{base_model_activations.1} parent=23 // pred_check
          %p296 = pneg %p98
        $region34: #{base_model_activations.1} parent=23 // pred_check_branch
          %298 = sbr.rel (%p296) target = $region36
        $region35: #{base_model_activations.1} parent=23 // pred_region
          %s300 = ssub.s32 128, 128
          %301 = vsyncadd %s269, %s300
          %s302 = smul.addr %s28, 128
          %s303 = scalar_lea.hbm %s2, %s302
          %s305 = sshll.u32 %s272, 4
          %s306 = int_to_ptr.vmem [resolvable:$true] %s305
          %308 = dma.vmem_to_hbm [thread:$0]  %s306, 128, %s303, %s269
        $region36: #{base_model_activations.1} parent=23 // pred_fallthru
          _
        // Predicated region
        $region37: #{base_model_activations.1} parent=23 // pred_check
          %p309 = pneg %p124
        $region38: #{base_model_activations.1} parent=23 // pred_check_branch
          %311 = sbr.rel (%p309) target = $region40
        $region39: #{base_model_activations.1} parent=23 // pred_region
          %s313 = ssub.s32 128, 128
          %314 = vsyncadd %s274, %s313
          %s315 = smul.addr %s28, 128
          %s316 = scalar_lea.hbm %s3, %s315
          %s318 = sshll.u32 %s277, 4
          %s319 = int_to_ptr.vmem [resolvable:$true] %s318
          %321 = dma.vmem_to_hbm [thread:$0]  %s319, 128, %s316, %s274
        $region40: #{base_model_activations.1} parent=23 // pred_fallthru
          _
        // Predicated region
        $region41: #{base_model_activations.1} parent=23 // pred_check
          %p322 = pneg %p150
        $region42: #{base_model_activations.1} parent=23 // pred_check_branch
          %324 = sbr.rel (%p322) target = $region44
        $region43: #{base_model_activations.1} parent=23 // pred_region
          %s326 = ssub.s32 128, 128
          %327 = vsyncadd %s279, %s326
          %s328 = smul.addr %s28, 128
          %s329 = scalar_lea.hbm %s4, %s328
          %s331 = sshll.u32 %s282, 4
          %s332 = int_to_ptr.vmem [resolvable:$true] %s331
          %334 = dma.vmem_to_hbm [thread:$0]  %s332, 128, %s329, %s279
        $region44: #{base_model_activations.1} parent=23 // pred_fallthru
          _
      $region24: #{base_model_activations.1} parent=5 // pred_fallthru
        _
      %p335 = scmp.le.s32.totalorder 2, %s23
      // Predicated region
      $region45: #{base_model_activations.1} parent=5 // pred_check
        %p336 = pneg %p335
      $region46: #{base_model_activations.1} parent=5 // pred_check_branch
        %338 = sbr.rel (%p336) target = $region48
      $region47: #{base_model_activations.1} parent=5 // pred_region
        %s339 = ssub.s32 %s23, 2
        // Predicated region
        $region49: #{base_model_activations.1} parent=47 // pred_check
          %p340 = pneg %p78
        $region50: #{base_model_activations.1} parent=47 // pred_check_branch
          %342 = sbr.rel (%p340) target = $region52
        $region51: #{base_model_activations.1} parent=47 // pred_region
          %s343 = sand.u32 %s63, 1
          %s344 = scalar_lea.sflag [#allocation4], %s343
          %s345 = sand.u32 %s63, 1
          %s346 = smul.addr %s345, 8
          %s347 = scalar_lea.vmem [#allocation5], %s346
          %348 = dma.done %s344, 128
        $region52: #{base_model_activations.1} parent=47 // pred_fallthru
          _
        // Predicated region
        $region53: #{base_model_activations.1} parent=47 // pred_check
          %p349 = pneg %p104
        $region54: #{base_model_activations.1} parent=47 // pred_check_branch
          %351 = sbr.rel (%p349) target = $region56
        $region55: #{base_model_activations.1} parent=47 // pred_region
          %s352 = sand.u32 %s29, 1
          %s353 = scalar_lea.sflag [#allocation7], %s352
          %s354 = sand.u32 %s89, 1
          %s355 = smul.addr %s354, 8
          %s356 = scalar_lea.vmem [#allocation6], %s355
          %357 = dma.done %s353, 128
        $region56: #{base_model_activations.1} parent=47 // pred_fallthru
          _
        // Predicated region
        $region57: #{base_model_activations.1} parent=47 // pred_check
          %p358 = pneg %p130
        $region58: #{base_model_activations.1} parent=47 // pred_check_branch
          %360 = sbr.rel (%p358) target = $region60
        $region59: #{base_model_activations.1} parent=47 // pred_region
          %s361 = sand.u32 %s29, 1
          %s362 = scalar_lea.sflag [#allocation7], %s361
          %s363 = sand.u32 %s115, 1
          %s364 = smul.addr %s363, 8
          %s365 = scalar_lea.vmem [#allocation8], %s364
          %366 = dma.done %s362, 128
        $region60: #{base_model_activations.1} parent=47 // pred_fallthru
          _
        // Predicated region
        $region61: #{base_model_activations.1} parent=47 // pred_check
          %p367 = pneg %p156
        $region62: #{base_model_activations.1} parent=47 // pred_check_branch
          %369 = sbr.rel (%p367) target = $region64
        $region63: #{base_model_activations.1} parent=47 // pred_region
          %s370 = sand.u32 %s141, 1
          %s371 = scalar_lea.sflag [#allocation10], %s370
          %s372 = sand.u32 %s141, 1
          %s373 = smul.addr %s372, 8
          %s374 = scalar_lea.vmem [#allocation9], %s373
          %375 = dma.done %s371, 128
        $region64: #{base_model_activations.1} parent=47 // pred_fallthru
          _
      $region48: #{base_model_activations.1} parent=5 // pred_fallthru
        _
    $region6: #{base_model_activations.1} parent=1 // loop_footer
      %s27 = sadd.s32 1, %s23
    $region7: #{base_model_activations.1} parent=1 // loop_footer_branch
      %22 = sbr.rel target = $region3
    $region8: #{base_model_activations.1} parent=1 // loop_exit
      _
    %376 = vsyncpa [#allocation3], 1
    %s377 = scalar_lea.sflag [#allocation3], 1
    %378 = vsyncpa %s377, 1
    %379 = vsyncpa [#allocation4], 1
    %s380 = scalar_lea.sflag [#allocation4], 1
    %381 = vsyncpa %s380, 1
    %382 = vsyncpa [#allocation7], 1
    %s383 = scalar_lea.sflag [#allocation7], 1
    %384 = vsyncpa %s383, 1
    %385 = vsyncpa [#allocation10], 1
    %s386 = scalar_lea.sflag [#allocation10], 1
    %387 = vsyncpa %s386, 1

</llo_original>
